<compile_context>
chip_gen: v5e
topology: v5e:2x2
jax: 0.10.0
libtpu: 0.0.40
codegen_flags: <defaults>
</compile_context>

<pallas_src>
import functools

import jax
import jax.numpy as jnp
from jax.experimental import pallas as pl
from jax.experimental.pallas import tpu as pltpu


def _round_up(n, m):
    return (n + m - 1) // m * m


def mlp_kernel(x_ref, w1_ref, b1_ref, w2_ref, b2_ref, o_ref):
    # Layer 1: f32 matmul on the MXU with f32 accumulation, bias add + ReLU on the VPU.
    h = jnp.dot(x_ref[...], w1_ref[...], preferred_element_type=jnp.float32)
    h = jnp.maximum(h + b1_ref[...], 0.0)
    # Layer 2: f32 matmul, fold the bias add into the output store.
    y = jnp.dot(h, w2_ref[...], preferred_element_type=jnp.float32)
    o_ref[...] = (y + b2_ref[...]).astype(o_ref.dtype)


def _pallas_mlp(x, w1, b1, w2, b2, *, tm, grid_m):
    B, H = x.shape
    H2 = w1.shape[1]
    return pl.pallas_call(
        mlp_kernel,
        out_shape=jax.ShapeDtypeStruct((B, H), x.dtype),
        grid_spec=pltpu.PrefetchScalarGridSpec(
            num_scalar_prefetch=0,
            grid=(grid_m,),
            in_specs=[
                pl.BlockSpec((tm, H), lambda i: (i, 0)),    # x tile (batch-tiled)
                pl.BlockSpec((H, H2), lambda i: (0, 0)),    # W1 (VMEM resident)
                pl.BlockSpec((1, H2), lambda i: (0, 0)),    # b1
                pl.BlockSpec((H2, H), lambda i: (0, 0)),    # W2 (VMEM resident)
                pl.BlockSpec((1, H), lambda i: (0, 0)),     # b2
            ],
            out_specs=pl.BlockSpec((tm, H), lambda i: (i, 0)),
        ),
        compiler_params=pltpu.CompilerParams(
            dimension_semantics=("arbitrary",),
        ),
    )(x, w1, b1, w2, b2)


@functools.partial(jax.jit, static_argnames=("tile_m",))
def simple_model_forward(x, w1, b1, w2, b2, *, tile_m=256):
    """x: [B, H] f32; w1: [H, 2H]; b1: [1, 2H]; w2: [2H, H]; b2: [1, H]. Returns [B, H] f32."""
    B, H = x.shape
    H_in, H2 = w1.shape
    assert H_in == H and w2.shape == (H2, H)
    assert b1.shape == (1, H2) and b2.shape == (1, H)

    if B <= tile_m:
        # Small-batch fast path: one grid step, full-extent blocks, no padding, no slice.
        return _pallas_mlp(x, w1, b1, w2, b2, tm=B, grid_m=1)

    # Large-batch path: tile the batch; pad rows up to a multiple of tile_m
    # (padded rows are garbage-in/garbage-out and sliced off afterwards).
    Bp = _round_up(B, tile_m)
    xp = jnp.pad(x, ((0, Bp - B), (0, 0)))
    out = _pallas_mlp(xp, w1, b1, w2, b2, tm=tile_m, grid_m=Bp // tile_m)
    return out[:B]


def init_params(key, hidden_size=64, dtype=jnp.float32):
    """Deterministic init mimicking nn.Linear default: U(-1/sqrt(fan_in), 1/sqrt(fan_in)).

    Biases are returned pre-shaped to 2D (1, features) so the forward pass needs no
    per-call reshape/pad ops.
    """
    H, H2 = hidden_size, hidden_size * 2
    k1, k2, k3, k4 = jax.random.split(key, 4)
    bound1 = 1.0 / jnp.sqrt(H)
    bound2 = 1.0 / jnp.sqrt(H2)
    w1 = jax.random.uniform(k1, (H, H2), dtype, minval=-bound1, maxval=bound1)
    b1 = jax.random.uniform(k2, (1, H2), dtype, minval=-bound1, maxval=bound1)
    w2 = jax.random.uniform(k3, (H2, H), dtype, minval=-bound2, maxval=bound2)
    b2 = jax.random.uniform(k4, (1, H), dtype, minval=-bound2, maxval=bound2)
    return w1, b1, w2, b2


if __name__ == "__main__":
    hidden_size = 64   # module default
    batch = 8          # small-batch fast path: grid=(1,), full-extent blocks

    key = jax.random.PRNGKey(0)
    kx, kp = jax.random.split(key)
    x = jax.random.normal(kx, (batch, hidden_size), jnp.float32)
    w1, b1, w2, b2 = init_params(kp, hidden_size)

    out = simple_model_forward(x, w1, b1, w2, b2)
    out = jax.block_until_ready(out)
    assert out.shape == (batch, hidden_size)

    # Pure-JAX f32 reference (same math as nn.Sequential(Linear, ReLU, Linear)).
    h_ref = jnp.maximum(
        jnp.dot(x, w1, preferred_element_type=jnp.float32) + b1, 0.0)
    ref = jnp.dot(h_ref, w2, preferred_element_type=jnp.float32) + b2
    assert jnp.allclose(out, ref, atol=2e-2, rtol=2e-2), (
        float(jnp.max(jnp.abs(out - ref))))

    print("KERNEL_OK")
</pallas_src>

<mosaic_0001>
module attributes {stable_mosaic.version = 11 : i64} {
  func.func @mlp_kernel(%arg0: i32, %arg1: memref<8x64xf32, #tpu.memory_space<vmem>>, %arg2: memref<64x128xf32, #tpu.memory_space<vmem>>, %arg3: memref<1x128xf32, #tpu.memory_space<vmem>>, %arg4: memref<128x64xf32, #tpu.memory_space<vmem>>, %arg5: memref<1x64xf32, #tpu.memory_space<vmem>>, %arg6: memref<8x64xf32, #tpu.memory_space<vmem>>) attributes {dimension_semantics = [#tpu.dimension_semantics<arbitrary>], iteration_bounds = array<i64: 1>, scalar_prefetch = 0 : i64, scratch_operands = 0 : i64, tpu.core_type = #tpu.core_type<tc>, window_params = [{transform_indices = @transform_0, window_bounds = array<i64: 8, 64>}, {pipeline_mode = #tpu.pipeline_mode<synchronous>, transform_indices = @transform_1, window_bounds = array<i64: 64, 128>}, {pipeline_mode = #tpu.pipeline_mode<synchronous>, transform_indices = @transform_2, window_bounds = array<i64: 1, 128>}, {pipeline_mode = #tpu.pipeline_mode<synchronous>, transform_indices = @transform_3, window_bounds = array<i64: 128, 64>}, {pipeline_mode = #tpu.pipeline_mode<synchronous>, transform_indices = @transform_4, window_bounds = array<i64: 1, 64>}, {transform_indices = @transform_5, window_bounds = array<i64: 8, 64>}]} {
    %c0 = arith.constant 0 : index
    %c0_0 = arith.constant 0 : index
    %0 = vector.load %arg1[%c0, %c0_0] : memref<8x64xf32, #tpu.memory_space<vmem>>, vector<8x64xf32>
    %c0_1 = arith.constant 0 : index
    %c0_2 = arith.constant 0 : index
    %1 = vector.load %arg2[%c0_1, %c0_2] : memref<64x128xf32, #tpu.memory_space<vmem>>, vector<64x128xf32>
    %cst = arith.constant dense<0.000000e+00> : vector<8x128xf32>
    %2 = tpu.matmul %0, %1, %cst {dimension_numbers = #tpu.dot_dimension_numbers<[1], [0], [0], [1], [0, 0, 1, 1], [], []>} : vector<8x64xf32>, vector<64x128xf32>, vector<8x128xf32> -> vector<8x128xf32>
    %c0_3 = arith.constant 0 : index
    %c0_4 = arith.constant 0 : index
    %3 = vector.load %arg3[%c0_3, %c0_4] : memref<1x128xf32, #tpu.memory_space<vmem>>, vector<1x128xf32>
    %4 = vector.broadcast %3 : vector<1x128xf32> to vector<8x128xf32>
    %5 = arith.addf %2, %4 : vector<8x128xf32>
    %cst_5 = arith.constant 0.000000e+00 : f32
    %6 = vector.broadcast %cst_5 : f32 to vector<8x128xf32>
    %7 = arith.maximumf %5, %6 : vector<8x128xf32>
    %c0_6 = arith.constant 0 : index
    %c0_7 = arith.constant 0 : index
    %8 = vector.load %arg4[%c0_6, %c0_7] : memref<128x64xf32, #tpu.memory_space<vmem>>, vector<128x64xf32>
    %cst_8 = arith.constant dense<0.000000e+00> : vector<8x64xf32>
    %9 = tpu.matmul %7, %8, %cst_8 {dimension_numbers = #tpu.dot_dimension_numbers<[1], [0], [0], [1], [0, 0, 1, 1], [], []>} : vector<8x128xf32>, vector<128x64xf32>, vector<8x64xf32> -> vector<8x64xf32>
    %c0_9 = arith.constant 0 : index
    %c0_10 = arith.constant 0 : index
    %10 = vector.load %arg5[%c0_9, %c0_10] : memref<1x64xf32, #tpu.memory_space<vmem>>, vector<1x64xf32>
    %11 = vector.broadcast %10 : vector<1x64xf32> to vector<8x64xf32>
    %12 = arith.addf %9, %11 : vector<8x64xf32>
    %c0_11 = arith.constant 0 : index
    %c0_12 = arith.constant 0 : index
    %13 = vector.load %arg6[%c0_11, %c0_12] : memref<8x64xf32, #tpu.memory_space<vmem>>, vector<8x64xf32>
    tpu.vector_store %arg6[%c0_11, %c0_12], %12 {strides = array<i32>} : memref<8x64xf32, #tpu.memory_space<vmem>>, vector<8x64xf32>,
    return
  }
  func.func @transform_0(%arg0: i32) -> (i32, i32) {
    %c0_i32 = arith.constant 0 : i32
    %c0_i32_0 = arith.constant 0 : i32
    return %arg0, %c0_i32 : i32, i32
  }
  func.func @transform_1(%arg0: i32) -> (i32, i32) {
    %c0_i32 = arith.constant 0 : i32
    %c0_i32_0 = arith.constant 0 : i32
    %c0_i32_1 = arith.constant 0 : i32
    return %c0_i32, %c0_i32_0 : i32, i32
  }
  func.func @transform_2(%arg0: i32) -> (i32, i32) {
    %c0_i32 = arith.constant 0 : i32
    %c0_i32_0 = arith.constant 0 : i32
    %c0_i32_1 = arith.constant 0 : i32
    return %c0_i32, %c0_i32_0 : i32, i32
  }
  func.func @transform_3(%arg0: i32) -> (i32, i32) {
    %c0_i32 = arith.constant 0 : i32
    %c0_i32_0 = arith.constant 0 : i32
    %c0_i32_1 = arith.constant 0 : i32
    return %c0_i32, %c0_i32_0 : i32, i32
  }
  func.func @transform_4(%arg0: i32) -> (i32, i32) {
    %c0_i32 = arith.constant 0 : i32
    %c0_i32_0 = arith.constant 0 : i32
    %c0_i32_1 = arith.constant 0 : i32
    return %c0_i32, %c0_i32_0 : i32, i32
  }
  func.func @transform_5(%arg0: i32) -> (i32, i32) {
    %c0_i32 = arith.constant 0 : i32
    %c0_i32_0 = arith.constant 0 : i32
    return %arg0, %c0_i32 : i32, i32
  }
}

</mosaic_0001>

<llo_original>
// kernel: simple_model_forward.1
$region0: #{simple_model_forward.1}
  #allocation0 [shape = 'u32[]', space=smem, size = 0x4, offset = 0x4, fixed_abs, tag = 'smem constant byte address 0x4 - core index']
  #allocation1 [shape = 'u32[72,128]{1,0:T(1,128)}', space=vmem, size = 0x9000, scoped, tag = 'internal scratch']
  %s0 = inlined_call_operand.vmem [shape: f32[8,64], index: 0, kind: input, shape index: {}]
  %s1 = inlined_call_operand.vmem [shape: f32[64,128], index: 1, kind: input, shape index: {}]
  %s2 = inlined_call_operand.vmem [shape: f32[1,128], index: 2, kind: input, shape index: {}]
  %s3 = inlined_call_operand.vmem [shape: f32[128,64], index: 3, kind: input, shape index: {}]
  %s4 = inlined_call_operand.vmem [shape: f32[1,64], index: 4, kind: input, shape index: {}]
  %s5 = inlined_call_operand.hbm [shape: f32[8,64], index: 5, kind: output, shape index: {}]
  %s6 = sld [smem:[#allocation0]]
  $region30: #{simple_model_forward.1} parent=0
    _
  %s8 = ssub.s32 1, %s6
  %s9 = scalar_select 0, %s8, %s6
  $region1: #{simple_model_forward.1} parent=0
    #allocation2 [shape = 'u8[4096]{0}', space=vmem, size = 0x1000, scoped, tag = 'output window, operand 0, single buffered']
    #allocation3 [shape = 's32[1]{0}', space=sflag, size = 0x4, scoped, tag = 'scoped memory for simple_model_forward.1']
    %10 = vsyncpa [#allocation3], 0
    // Predicated region
    $region2: #{simple_model_forward.1} parent=1 // pred_check
      _
    $region3: #{simple_model_forward.1} parent=1 // pred_check_branch
      %12 = sbr.rel (0) target = $region5
    $region4: #{simple_model_forward.1} parent=1 // pred_region
      _
    $region5: #{simple_model_forward.1} parent=1 // pred_fallthru
      _
    // Predicated region
    $region6: #{simple_model_forward.1} parent=1 // pred_check
      _
    $region7: #{simple_model_forward.1} parent=1 // pred_check_branch
      %14 = sbr.rel (0) target = $region9
    $region8: #{simple_model_forward.1} parent=1 // pred_region
      _
    $region9: #{simple_model_forward.1} parent=1 // pred_fallthru
      _
    // Predicated region
    $region10: #{simple_model_forward.1} parent=1 // pred_check
      _
    $region11: #{simple_model_forward.1} parent=1 // pred_check_branch
      %16 = sbr.rel (0) target = $region13
    $region12: #{simple_model_forward.1} parent=1 // pred_region
      _
    $region13: #{simple_model_forward.1} parent=1 // pred_fallthru
      _
    // Predicated region
    $region14: #{simple_model_forward.1} parent=1 // pred_check
      _
    $region15: #{simple_model_forward.1} parent=1 // pred_check_branch
      %18 = sbr.rel (0) target = $region17
    $region16: #{simple_model_forward.1} parent=1 // pred_region
      _
    $region17: #{simple_model_forward.1} parent=1 // pred_fallthru
      _
    // Predicated region
    $region18: #{simple_model_forward.1} parent=1 // pred_check
      _
    $region19: #{simple_model_forward.1} parent=1 // pred_check_branch
      %20 = sbr.rel (0) target = $region21
    $region20: #{simple_model_forward.1} parent=1 // pred_region
      _
    $region21: #{simple_model_forward.1} parent=1 // pred_fallthru
      _
    %v21 = vld [vmem:[%s0] sm:$0xff]
    %v22 = vld [vmem:[%s1] sm:$0xff]
    %v23 = vld [vmem:[%s1 + $0x8] sm:$0xff]
    %v24 = vld [vmem:[%s1 + $0x10] sm:$0xff]
    %v25 = vld [vmem:[%s1 + $0x18] sm:$0xff]
    %v26 = vld [vmem:[%s1 + $0x20] sm:$0xff]
    %v27 = vld [vmem:[%s1 + $0x28] sm:$0xff]
    %v28 = vld [vmem:[%s1 + $0x30] sm:$0xff]
    %v29 = vld [vmem:[%s1 + $0x38] sm:$0xff]
    %v30 = vld [vmem:[%s2] sm:$0x1]
    %v32 = vperm.slane %v30, 0
    %vm34 = vcmask 523264
    %v36 = vsel %vm34, %v21, 0
    %38 = vmatpush.msra.mxu0 0.0
    %39 = vmatpush.msra.mxu0 0.0
    %40 = vmatpush.msra.mxu0 0.0
    %41 = vmatpush.msra.mxu0 0.0
    %42 = vmatpush.msra.mxu0 0.0
    %43 = vmatpush.msra.mxu0 0.0
    %44 = vmatpush.msra.mxu0 0.0
    %45 = vmatpush.msra.mxu0 0.0
    %46 = vmatpush.msra.mxu0 %v29
    %47 = vmatpush.msra.mxu0 %v28
    %48 = vmatpush.msra.mxu0 %v27
    %49 = vmatpush.msra.mxu0 %v26
    %50 = vmatpush.msra.mxu0 %v25
    %51 = vmatpush.msra.mxu0 %v24
    %52 = vmatpush.msra.mxu0 %v23
    %53 = vmatpush.msra.mxu0 %v22
    %54 = vmatmul.f32.gmra.mxu0 %v36
    %v55 = vpop.f32.mrf.mxu0
    %v56 = vadd.f32 %v32, %v55
    %57 = vdwg.mxu0
    %v58 = vmax.f32 %v56, 0.0
    %v59 = vld [vmem:[%s3] sm:$0xff]
    %v60 = vld [vmem:[%s3 + $0x8] sm:$0xff]
    %v61 = vld [vmem:[%s3 + $0x10] sm:$0xff]
    %v62 = vld [vmem:[%s3 + $0x18] sm:$0xff]
    %v63 = vld [vmem:[%s3 + $0x20] sm:$0xff]
    %v64 = vld [vmem:[%s3 + $0x28] sm:$0xff]
    %v65 = vld [vmem:[%s3 + $0x30] sm:$0xff]
    %v66 = vld [vmem:[%s3 + $0x38] sm:$0xff]
    %v67 = vld [vmem:[%s3 + $0x40] sm:$0xff]
    %v68 = vld [vmem:[%s3 + $0x48] sm:$0xff]
    %v69 = vld [vmem:[%s3 + $0x50] sm:$0xff]
    %v70 = vld [vmem:[%s3 + $0x58] sm:$0xff]
    %v71 = vld [vmem:[%s3 + $0x60] sm:$0xff]
    %v72 = vld [vmem:[%s3 + $0x68] sm:$0xff]
    %v73 = vld [vmem:[%s3 + $0x70] sm:$0xff]
    %v74 = vld [vmem:[%s3 + $0x78] sm:$0xff]
    %v75 = vld [vmem:[%s4] sm:$0x1]
    %v77 = vperm.slane %v75, 0
    %79 = vmatpush.msra.mxu0 %v74
    %80 = vmatpush.msra.mxu0 %v73
    %81 = vmatpush.msra.mxu0 %v72
    %82 = vmatpush.msra.mxu0 %v71
    %83 = vmatpush.msra.mxu0 %v70
    %84 = vmatpush.msra.mxu0 %v69
    %85 = vmatpush.msra.mxu0 %v68
    %86 = vmatpush.msra.mxu0 %v67
    %87 = vmatpush.msra.mxu0 %v66
    %88 = vmatpush.msra.mxu0 %v65
    %89 = vmatpush.msra.mxu0 %v64
    %90 = vmatpush.msra.mxu0 %v63
    %91 = vmatpush.msra.mxu0 %v62
    %92 = vmatpush.msra.mxu0 %v61
    %93 = vmatpush.msra.mxu0 %v60
    %94 = vmatpush.msra.mxu0 %v59
    %95 = vmatmul.f32.gmra.mxu0 %v58
    %v96 = vpop.f32.mrf.mxu0
    %v97 = vadd.f32 %v77, %v96
    %98 = vdwg.mxu0
    %99 = vst.msk [vmem:[#allocation2] sm:$0xff] %vm34, %v97
    // Predicated region
    $region22: #{simple_model_forward.1} parent=1 // pred_check
      _
    $region23: #{simple_model_forward.1} parent=1 // pred_check_branch
      %101 = sbr.rel (0) target = $region25
    $region24: #{simple_model_forward.1} parent=1 // pred_region
      %103 = vsyncadd [#allocation3], 0
      %s105 = sshll.u32 [#allocation2], 4
      %s106 = int_to_ptr.vmem [resolvable:$true] %s105
      %s107 = sshll.u32 %s5, 4
      %s108 = int_to_ptr.hbm [resolvable:$true] %s107
      %110 = dma.vmem_to_hbm [thread:$0]  %s106, 128, %s108, [#allocation3]
    $region25: #{simple_model_forward.1} parent=1 // pred_fallthru
      _
    // Predicated region
    $region26: #{simple_model_forward.1} parent=1 // pred_check
      _
    $region27: #{simple_model_forward.1} parent=1 // pred_check_branch
      %112 = sbr.rel (0) target = $region29
    $region28: #{simple_model_forward.1} parent=1 // pred_region
      %114 = dma.done [#allocation3], 128
    $region29: #{simple_model_forward.1} parent=1 // pred_fallthru
      _
    %115 = vsyncpa [#allocation3], 1

</llo_original>
